<compile_context>
chip_gen: v5e
topology: v5e:2x2
jax: 0.10.0
libtpu: 0.0.40
codegen_flags: <defaults>
</compile_context>

<pallas_src>
import functools

import jax
import jax.numpy as jnp
from jax.experimental import pallas as pl
from jax.experimental.pallas import tpu as pltpu

IN_FEATURES = 10
HIDDEN = 256
OUT_FEATURES = 10
OUT_PAD = 128  # lane-dense padded output width (multiple of 128 lanes)


def mlp_kernel(x_ref, w1_ref, b1_ref, w2_ref, b2_ref, o_ref):
    # hidden = relu(x @ W1 + b1)  -- MXU matmul + VPU elementwise, f32 throughout
    h = jnp.dot(x_ref[...], w1_ref[...], preferred_element_type=jnp.float32)
    h = jnp.maximum(h + b1_ref[...], 0.0)            # (bm, HID) + (1, HID) broadcast
    # out = hidden @ W2_padded + b2_padded  (128-wide output block -> unmasked vst)
    o = jnp.dot(h, w2_ref[...], preferred_element_type=jnp.float32)
    o_ref[...] = (o + b2_ref[...]).astype(o_ref.dtype)


def _choose_block_m(B, block_m):
    """Batch tile size.

    Small B (<= block_m): one grid step whose block equals the full batch dim
    (a full-array-dim block is always a legal block shape, no tail tile, minimal
    per-step overhead).  Large B: tile at block_m (multiple of 8); the grid then
    has multiple "parallel" steps that v7x can shard across its 2 TensorCores.
    """
    block_m = max(8, (block_m // 8) * 8)
    if B <= block_m:
        return B
    return block_m


def prepare_params(w2, b2):
    """One-time lane-dense padding of the output projection to 128 columns.

    Call once at parameter-setup time (not per forward): the extra columns are
    zeros, so padded outputs 10..127 are exactly zero and are sliced off inside
    the jitted forward.
    """
    w2p = jnp.pad(w2, ((0, 0), (0, OUT_PAD - OUT_FEATURES)))
    b2p = jnp.pad(b2, ((0, 0), (0, OUT_PAD - OUT_FEATURES)))
    return w2p, b2p


@functools.partial(jax.jit, static_argnames=("block_m",))
def mlp_forward(x, w1, b1, w2p, b2p, block_m=1024):
    """Fused forward: pallas_call + (B,128)->(B,10) slice, all inside one jit."""
    B = x.shape[0]
    bm = _choose_block_m(B, block_m)
    grid = (pl.cdiv(B, bm),)

    itemsize = jnp.dtype(x.dtype).itemsize
    flops = 2 * B * (IN_FEATURES * HIDDEN + HIDDEN * OUT_PAD)
    bytes_accessed = itemsize * (
        x.size + w1.size + b1.size + w2p.size + b2p.size + B * OUT_PAD)

    out_padded = pl.pallas_call(
        mlp_kernel,
        out_shape=jax.ShapeDtypeStruct((B, OUT_PAD), x.dtype),
        grid_spec=pltpu.PrefetchScalarGridSpec(
            num_scalar_prefetch=0,
            grid=grid,
            in_specs=[
                # x: tile along batch, full feature dim (10 == full array dim, allowed)
                pl.BlockSpec((bm, IN_FEATURES), lambda i: (i, 0)),
                # weights / biases: whole arrays resident in VMEM, same block every step
                pl.BlockSpec((IN_FEATURES, HIDDEN), lambda i: (0, 0)),
                pl.BlockSpec((1, HIDDEN), lambda i: (0, 0)),
                pl.BlockSpec((HIDDEN, OUT_PAD), lambda i: (0, 0)),
                pl.BlockSpec((1, OUT_PAD), lambda i: (0, 0)),
            ],
            out_specs=pl.BlockSpec((bm, OUT_PAD), lambda i: (i, 0)),
        ),
        compiler_params=pltpu.CompilerParams(
            dimension_semantics=("parallel",)),
        cost_estimate=pl.CostEstimate(
            flops=flops, transcendentals=0, bytes_accessed=bytes_accessed),
    )(x, w1, b1, w2p, b2p)

    # Slice back to the real 10 output features; fused by XLA with the caller.
    return out_padded[:, :OUT_FEATURES]


def init_params(key):
    """Deterministic init matching nn.Linear default: U(-1/sqrt(fan_in), 1/sqrt(fan_in))."""
    k1, k2, k3, k4 = jax.random.split(key, 4)
    bound1 = 1.0 / jnp.sqrt(IN_FEATURES)
    bound2 = 1.0 / jnp.sqrt(HIDDEN)
    w1 = jax.random.uniform(k1, (IN_FEATURES, HIDDEN), jnp.float32, -bound1, bound1)
    b1 = jax.random.uniform(k2, (1, HIDDEN), jnp.float32, -bound1, bound1)
    w2 = jax.random.uniform(k3, (HIDDEN, OUT_FEATURES), jnp.float32, -bound2, bound2)
    b2 = jax.random.uniform(k4, (1, OUT_FEATURES), jnp.float32, -bound2, bound2)
    return w1, b1, w2, b2


if __name__ == "__main__":
    key = jax.random.PRNGKey(0)
    kx, kp = jax.random.split(key)

    B = 20
    x = jax.random.normal(kx, (B, IN_FEATURES), jnp.float32)
    w1, b1, w2, b2 = init_params(kp)
    w2p, b2p = prepare_params(w2, b2)   # one-time lane padding of the output projection

    ref = jnp.maximum(x @ w1 + b1, 0.0) @ w2 + b2

    # 1) default path: B=20 <= block_m -> single grid step with a full-batch block
    out = mlp_forward(x, w1, b1, w2p, b2p)
    jax.block_until_ready(out)
    assert out.shape == (B, OUT_FEATURES)
    assert jnp.allclose(out, ref, atol=1e-4, rtol=1e-4)

    # 2) forced small tile: exercises the multi-step (tiled + clipped tail) grid path
    out_tiled = mlp_forward(x, w1, b1, w2p, b2p, block_m=8)
    jax.block_until_ready(out_tiled)
    assert jnp.allclose(out_tiled, ref, atol=1e-4, rtol=1e-4)

    print("KERNEL_OK")
</pallas_src>

<mosaic_0001>
module attributes {stable_mosaic.version = 11 : i64} {
  func.func @mlp_kernel(%arg0: i32, %arg1: memref<20x10xf32, #tpu.memory_space<vmem>>, %arg2: memref<10x256xf32, #tpu.memory_space<vmem>>, %arg3: memref<1x256xf32, #tpu.memory_space<vmem>>, %arg4: memref<256x128xf32, #tpu.memory_space<vmem>>, %arg5: memref<1x128xf32, #tpu.memory_space<vmem>>, %arg6: memref<20x128xf32, #tpu.memory_space<vmem>>) attributes {dimension_semantics = [#tpu.dimension_semantics<parallel>], iteration_bounds = array<i64: 1>, scalar_prefetch = 0 : i64, scratch_operands = 0 : i64, tpu.core_type = #tpu.core_type<tc>, window_params = [{transform_indices = @transform_0, window_bounds = array<i64: 20, 10>}, {pipeline_mode = #tpu.pipeline_mode<synchronous>, transform_indices = @transform_1, window_bounds = array<i64: 10, 256>}, {pipeline_mode = #tpu.pipeline_mode<synchronous>, transform_indices = @transform_2, window_bounds = array<i64: 1, 256>}, {pipeline_mode = #tpu.pipeline_mode<synchronous>, transform_indices = @transform_3, window_bounds = array<i64: 256, 128>}, {pipeline_mode = #tpu.pipeline_mode<synchronous>, transform_indices = @transform_4, window_bounds = array<i64: 1, 128>}, {transform_indices = @transform_5, window_bounds = array<i64: 20, 128>}]} {
    %c0 = arith.constant 0 : index
    %c0_0 = arith.constant 0 : index
    %0 = vector.load %arg1[%c0, %c0_0] : memref<20x10xf32, #tpu.memory_space<vmem>>, vector<20x10xf32>
    %c0_1 = arith.constant 0 : index
    %c0_2 = arith.constant 0 : index
    %1 = vector.load %arg2[%c0_1, %c0_2] : memref<10x256xf32, #tpu.memory_space<vmem>>, vector<10x256xf32>
    %cst = arith.constant dense<0.000000e+00> : vector<20x256xf32>
    %2 = tpu.matmul %0, %1, %cst {dimension_numbers = #tpu.dot_dimension_numbers<[1], [0], [0], [1], [0, 0, 1, 1], [], []>} : vector<20x10xf32>, vector<10x256xf32>, vector<20x256xf32> -> vector<20x256xf32>
    %c0_3 = arith.constant 0 : index
    %c0_4 = arith.constant 0 : index
    %3 = vector.load %arg3[%c0_3, %c0_4] : memref<1x256xf32, #tpu.memory_space<vmem>>, vector<1x256xf32>
    %4 = vector.broadcast %3 : vector<1x256xf32> to vector<20x256xf32>
    %5 = arith.addf %2, %4 : vector<20x256xf32>
    %cst_5 = arith.constant 0.000000e+00 : f32
    %6 = vector.broadcast %cst_5 : f32 to vector<20x256xf32>
    %7 = arith.maximumf %5, %6 : vector<20x256xf32>
    %c0_6 = arith.constant 0 : index
    %c0_7 = arith.constant 0 : index
    %8 = vector.load %arg4[%c0_6, %c0_7] : memref<256x128xf32, #tpu.memory_space<vmem>>, vector<256x128xf32>
    %cst_8 = arith.constant dense<0.000000e+00> : vector<20x128xf32>
    %9 = tpu.matmul %7, %8, %cst_8 {dimension_numbers = #tpu.dot_dimension_numbers<[1], [0], [0], [1], [0, 0, 1, 1], [], []>} : vector<20x256xf32>, vector<256x128xf32>, vector<20x128xf32> -> vector<20x128xf32>
    %c0_9 = arith.constant 0 : index
    %c0_10 = arith.constant 0 : index
    %10 = vector.load %arg5[%c0_9, %c0_10] : memref<1x128xf32, #tpu.memory_space<vmem>>, vector<1x128xf32>
    %11 = vector.broadcast %10 : vector<1x128xf32> to vector<20x128xf32>
    %12 = arith.addf %9, %11 : vector<20x128xf32>
    %c0_11 = arith.constant 0 : index
    %c0_12 = arith.constant 0 : index
    %13 = vector.load %arg6[%c0_11, %c0_12] : memref<20x128xf32, #tpu.memory_space<vmem>>, vector<20x128xf32>
    tpu.vector_store %arg6[%c0_11, %c0_12], %12 {strides = array<i32>} : memref<20x128xf32, #tpu.memory_space<vmem>>, vector<20x128xf32>,
    return
  }
  func.func @transform_0(%arg0: i32) -> (i32, i32) {
    %c0_i32 = arith.constant 0 : i32
    %c0_i32_0 = arith.constant 0 : i32
    return %arg0, %c0_i32 : i32, i32
  }
  func.func @transform_1(%arg0: i32) -> (i32, i32) {
    %c0_i32 = arith.constant 0 : i32
    %c0_i32_0 = arith.constant 0 : i32
    %c0_i32_1 = arith.constant 0 : i32
    return %c0_i32, %c0_i32_0 : i32, i32
  }
  func.func @transform_2(%arg0: i32) -> (i32, i32) {
    %c0_i32 = arith.constant 0 : i32
    %c0_i32_0 = arith.constant 0 : i32
    %c0_i32_1 = arith.constant 0 : i32
    return %c0_i32, %c0_i32_0 : i32, i32
  }
  func.func @transform_3(%arg0: i32) -> (i32, i32) {
    %c0_i32 = arith.constant 0 : i32
    %c0_i32_0 = arith.constant 0 : i32
    %c0_i32_1 = arith.constant 0 : i32
    return %c0_i32, %c0_i32_0 : i32, i32
  }
  func.func @transform_4(%arg0: i32) -> (i32, i32) {
    %c0_i32 = arith.constant 0 : i32
    %c0_i32_0 = arith.constant 0 : i32
    %c0_i32_1 = arith.constant 0 : i32
    return %c0_i32, %c0_i32_0 : i32, i32
  }
  func.func @transform_5(%arg0: i32) -> (i32, i32) {
    %c0_i32 = arith.constant 0 : i32
    %c0_i32_0 = arith.constant 0 : i32
    return %arg0, %c0_i32 : i32, i32
  }
}

</mosaic_0001>

<llo_original>
// kernel: mlp_forward.1
$region0: #{mlp_forward.1}
  #allocation0 [shape = 'u32[]', space=smem, size = 0x4, offset = 0x4, fixed_abs, tag = 'smem constant byte address 0x4 - core index']
  #allocation1 [shape = 'u32[72,128]{1,0:T(1,128)}', space=vmem, size = 0x9000, scoped, tag = 'internal scratch']
  %s0 = inlined_call_operand.vmem [shape: f32[20,10], index: 0, kind: input, shape index: {}]
  %s1 = inlined_call_operand.vmem [shape: f32[10,256], index: 1, kind: input, shape index: {}]
  %s2 = inlined_call_operand.vmem [shape: f32[1,256], index: 2, kind: input, shape index: {}]
  %s3 = inlined_call_operand.hbm [shape: f32[256,128], index: 3, kind: input, shape index: {}]
  %s4 = inlined_call_operand.vmem [shape: f32[1,128], index: 4, kind: input, shape index: {}]
  %s5 = inlined_call_operand.vmem [shape: f32[20,128], index: 5, kind: output, shape index: {}]
  %s6 = sld [smem:[#allocation0]]
  $region34: #{mlp_forward.1} parent=0
    _
  %s8 = ssub.s32 1, %s6
  %s9 = scalar_select 0, %s8, %s6
  $region1: #{mlp_forward.1} parent=0
    #allocation2 [shape = 'u8[131072]{0}', space=vmem, size = 0x20000, scoped, tag = 'input window, operand 3, single buffered']
    #allocation3 [shape = 's32[1]{0}', space=sflag, size = 0x4, scoped, tag = 'scoped memory for mlp_forward.1']
    %10 = vsyncpa [#allocation3], 0
    // Predicated region
    $region2: #{mlp_forward.1} parent=1 // pred_check
      _
    $region3: #{mlp_forward.1} parent=1 // pred_check_branch
      %12 = sbr.rel (0) target = $region5
    $region4: #{mlp_forward.1} parent=1 // pred_region
      _
    $region5: #{mlp_forward.1} parent=1 // pred_fallthru
      _
    // Predicated region
    $region6: #{mlp_forward.1} parent=1 // pred_check
      _
    $region7: #{mlp_forward.1} parent=1 // pred_check_branch
      %14 = sbr.rel (0) target = $region9
    $region8: #{mlp_forward.1} parent=1 // pred_region
      _
    $region9: #{mlp_forward.1} parent=1 // pred_fallthru
      _
    // Predicated region
    $region10: #{mlp_forward.1} parent=1 // pred_check
      _
    $region11: #{mlp_forward.1} parent=1 // pred_check_branch
      %16 = sbr.rel (0) target = $region13
    $region12: #{mlp_forward.1} parent=1 // pred_region
      _
    $region13: #{mlp_forward.1} parent=1 // pred_fallthru
      _
    // Predicated region
    $region14: #{mlp_forward.1} parent=1 // pred_check
      _
    $region15: #{mlp_forward.1} parent=1 // pred_check_branch
      %18 = sbr.rel (0) target = $region17
    $region16: #{mlp_forward.1} parent=1 // pred_region
      %20 = vsyncadd [#allocation3], 0
      %s21 = sshll.u32 %s3, 4
      %s22 = int_to_ptr.hbm [resolvable:$true] %s21
      %s23 = sshll.u32 [#allocation2], 4
      %s24 = int_to_ptr.vmem [resolvable:$true] %s23
      %29 = dma.hbm_to_vmem [thread:$0]  %s22, 4096, %s24, [#allocation3], 128, 128, 8
    $region17: #{mlp_forward.1} parent=1 // pred_fallthru
      _
    // Predicated region
    $region18: #{mlp_forward.1} parent=1 // pred_check
      _
    $region19: #{mlp_forward.1} parent=1 // pred_check_branch
      %31 = sbr.rel (0) target = $region21
    $region20: #{mlp_forward.1} parent=1 // pred_region
      _
    $region21: #{mlp_forward.1} parent=1 // pred_fallthru
      _
    // Predicated region
    $region22: #{mlp_forward.1} parent=1 // pred_check
      _
    $region23: #{mlp_forward.1} parent=1 // pred_check_branch
      %33 = sbr.rel (0) target = $region25
    $region24: #{mlp_forward.1} parent=1 // pred_region
      %35 = dma.done [#allocation3], 4096
    $region25: #{mlp_forward.1} parent=1 // pred_fallthru
      _
    %v36 = vld [vmem:[%s0] sm:$0xff]
    %v37 = vld [vmem:[%s0 + $0x8] sm:$0xff]
    %v38 = vld [vmem:[%s0 + $0x10] sm:$0xf]
    %v39 = vld [vmem:[%s1] sm:$0xff]
    %v40 = vld [vmem:[%s1 + $0x8] sm:$0xff]
    %v41 = vld [vmem:[%s1 + $0x10] sm:$0x3]
    %v42 = vld [vmem:[%s1 + $0x18] sm:$0x3]
    %v43 = vld [vmem:[%s2] sm:$0x3]
    %v45 = vperm.slane %v43, 0
    %v46 = vperm.slane %v43, 1
    %vm49 = vcmask 80896
    %v51 = vsel %vm49, %v36, 0
    %v54 = vsel %vm49, %v37, 0
    %v57 = vsel %vm49, %v38, 0
    %vm59 = vcmask 1041408
    %v61 = vsel %vm59, %v41, 0
    %v64 = vsel %vm59, %v42, 0
    %66 = vmatpush.msra.mxu0 0.0
    %67 = vmatpush.msra.mxu0 0.0
    %68 = vmatpush.msra.mxu0 0.0
    %69 = vmatpush.msra.mxu0 0.0
    %70 = vmatpush.msra.mxu0 0.0
    %71 = vmatpush.msra.mxu0 0.0
    %72 = vmatpush.msra.mxu0 0.0
    %73 = vmatpush.msra.mxu0 0.0
    %74 = vmatpush.msra.mxu0 0.0
    %75 = vmatpush.msra.mxu0 0.0
    %76 = vmatpush.msra.mxu0 0.0
    %77 = vmatpush.msra.mxu0 0.0
    %78 = vmatpush.msra.mxu0 0.0
    %79 = vmatpush.msra.mxu0 0.0
    %80 = vmatpush.msra.mxu0 %v61
    %81 = vmatpush.msra.mxu0 %v39
    %82 = vmatmul.f32.gmra.mxu0 %v51
    %v83 = vpop.f32.mrf.mxu0
    %v84 = vadd.f32 %v45, %v83
    %85 = vmatmul.f32.gmra.mxu0 %v54
    %v86 = vpop.f32.mrf.mxu0
    %v87 = vadd.f32 %v45, %v86
    %88 = vmatmul.f32.gmra.mxu0 %v57
    %v89 = vpop.f32.mrf.mxu0
    %v90 = vadd.f32 %v45, %v89
    %91 = vdwg.mxu0
    %92 = vmatpush.msra.mxu0 0.0
    %93 = vmatpush.msra.mxu0 0.0
    %94 = vmatpush.msra.mxu0 0.0
    %95 = vmatpush.msra.mxu0 0.0
    %96 = vmatpush.msra.mxu0 0.0
    %97 = vmatpush.msra.mxu0 0.0
    %98 = vmatpush.msra.mxu0 0.0
    %99 = vmatpush.msra.mxu0 0.0
    %100 = vmatpush.msra.mxu0 0.0
    %101 = vmatpush.msra.mxu0 0.0
    %102 = vmatpush.msra.mxu0 0.0
    %103 = vmatpush.msra.mxu0 0.0
    %104 = vmatpush.msra.mxu0 0.0
    %105 = vmatpush.msra.mxu0 0.0
    %106 = vmatpush.msra.mxu0 %v64
    %107 = vmatpush.msra.mxu0 %v40
    %108 = vmatmul.f32.gmra.mxu0 %v51
    %v109 = vpop.f32.mrf.mxu0
    %v110 = vadd.f32 %v46, %v109
    %111 = vmatmul.f32.gmra.mxu0 %v54
    %v112 = vpop.f32.mrf.mxu0
    %v113 = vadd.f32 %v46, %v112
    %114 = vmatmul.f32.gmra.mxu0 %v57
    %v115 = vpop.f32.mrf.mxu0
    %v116 = vadd.f32 %v46, %v115
    %117 = vdwg.mxu0
    %v118 = vmax.f32 %v84, 0.0
    %v119 = vmax.f32 %v110, 0.0
    %v120 = vmax.f32 %v87, 0.0
    %v121 = vmax.f32 %v113, 0.0
    %v122 = vmax.f32 %v90, 0.0
    %v123 = vmax.f32 %v116, 0.0
    %v124 = vld [vmem:[#allocation2] sm:$0xff]
    %v125 = vld [vmem:[#allocation2 + $0x8] sm:$0xff]
    %v126 = vld [vmem:[#allocation2 + $0x10] sm:$0xff]
    %v127 = vld [vmem:[#allocation2 + $0x18] sm:$0xff]
    %v128 = vld [vmem:[#allocation2 + $0x20] sm:$0xff]
    %v129 = vld [vmem:[#allocation2 + $0x28] sm:$0xff]
    %v130 = vld [vmem:[#allocation2 + $0x30] sm:$0xff]
    %v131 = vld [vmem:[#allocation2 + $0x38] sm:$0xff]
    %v132 = vld [vmem:[#allocation2 + $0x40] sm:$0xff]
    %v133 = vld [vmem:[#allocation2 + $0x48] sm:$0xff]
    %v134 = vld [vmem:[#allocation2 + $0x50] sm:$0xff]
    %v135 = vld [vmem:[#allocation2 + $0x58] sm:$0xff]
    %v136 = vld [vmem:[#allocation2 + $0x60] sm:$0xff]
    %v137 = vld [vmem:[#allocation2 + $0x68] sm:$0xff]
    %v138 = vld [vmem:[#allocation2 + $0x70] sm:$0xff]
    %v139 = vld [vmem:[#allocation2 + $0x78] sm:$0xff]
    %v140 = vld [vmem:[#allocation2 + $0x80] sm:$0xff]
    %v141 = vld [vmem:[#allocation2 + $0x88] sm:$0xff]
    %v142 = vld [vmem:[#allocation2 + $0x90] sm:$0xff]
    %v143 = vld [vmem:[#allocation2 + $0x98] sm:$0xff]
    %v144 = vld [vmem:[#allocation2 + $0xa0] sm:$0xff]
    %v145 = vld [vmem:[#allocation2 + $0xa8] sm:$0xff]
    %v146 = vld [vmem:[#allocation2 + $0xb0] sm:$0xff]
    %v147 = vld [vmem:[#allocation2 + $0xb8] sm:$0xff]
    %v148 = vld [vmem:[#allocation2 + $0xc0] sm:$0xff]
    %v149 = vld [vmem:[#allocation2 + $0xc8] sm:$0xff]
    %v150 = vld [vmem:[#allocation2 + $0xd0] sm:$0xff]
    %v151 = vld [vmem:[#allocation2 + $0xd8] sm:$0xff]
    %v152 = vld [vmem:[#allocation2 + $0xe0] sm:$0xff]
    %v153 = vld [vmem:[#allocation2 + $0xe8] sm:$0xff]
    %v154 = vld [vmem:[#allocation2 + $0xf0] sm:$0xff]
    %v155 = vld [vmem:[#allocation2 + $0xf8] sm:$0xff]
    %v156 = vld [vmem:[%s4] sm:$0x1]
    %v158 = vperm.slane %v156, 0
    %160 = vmatpush.msra.mxu0 %v139
    %161 = vmatpush.msra.mxu0 %v138
    %162 = vmatpush.msra.mxu0 %v137
    %163 = vmatpush.msra.mxu0 %v136
    %164 = vmatpush.msra.mxu0 %v135
    %165 = vmatpush.msra.mxu0 %v134
    %166 = vmatpush.msra.mxu0 %v133
    %167 = vmatpush.msra.mxu0 %v132
    %168 = vmatpush.msra.mxu0 %v131
    %169 = vmatpush.msra.mxu0 %v130
    %170 = vmatpush.msra.mxu0 %v129
    %171 = vmatpush.msra.mxu0 %v128
    %172 = vmatpush.msra.mxu0 %v127
    %173 = vmatpush.msra.mxu0 %v126
    %174 = vmatpush.msra.mxu0 %v125
    %175 = vmatpush.msra.mxu0 %v124
    %176 = vmatmul.f32.gmra.mxu0 %v118
    %v177 = vpop.f32.mrf.mxu0
    %v178 = vadd.f32 %v158, %v177
    %179 = vmatmul.f32.gmra.mxu0 %v120
    %v180 = vpop.f32.mrf.mxu0
    %v181 = vadd.f32 %v158, %v180
    %182 = vmatmul.f32.gmra.mxu0 %v122
    %v183 = vpop.f32.mrf.mxu0
    %v184 = vadd.f32 %v158, %v183
    %185 = vdwg.mxu0
    %186 = vmatpush.msra.mxu0 %v155
    %187 = vmatpush.msra.mxu0 %v154
    %188 = vmatpush.msra.mxu0 %v153
    %189 = vmatpush.msra.mxu0 %v152
    %190 = vmatpush.msra.mxu0 %v151
    %191 = vmatpush.msra.mxu0 %v150
    %192 = vmatpush.msra.mxu0 %v149
    %193 = vmatpush.msra.mxu0 %v148
    %194 = vmatpush.msra.mxu0 %v147
    %195 = vmatpush.msra.mxu0 %v146
    %196 = vmatpush.msra.mxu0 %v145
    %197 = vmatpush.msra.mxu0 %v144
    %198 = vmatpush.msra.mxu0 %v143
    %199 = vmatpush.msra.mxu0 %v142
    %200 = vmatpush.msra.mxu0 %v141
    %201 = vmatpush.msra.mxu0 %v140
    %202 = vmatmul.f32.gmra.mxu0 %v119
    %v203 = vpop.f32.mrf.mxu0
    %v204 = vadd.f32 %v178, %v203
    %205 = vmatmul.f32.gmra.mxu0 %v121
    %v206 = vpop.f32.mrf.mxu0
    %v207 = vadd.f32 %v181, %v206
    %208 = vmatmul.f32.gmra.mxu0 %v123
    %v209 = vpop.f32.mrf.mxu0
    %v210 = vadd.f32 %v184, %v209
    %211 = vdwg.mxu0
    %212 = vst [vmem:[%s5] sm:$0xff] %v204
    %213 = vst [vmem:[%s5 + $0x8] sm:$0xff] %v207
    %214 = vst [vmem:[%s5 + $0x10] sm:$0xf] %v210
    // Predicated region
    $region26: #{mlp_forward.1} parent=1 // pred_check
      _
    $region27: #{mlp_forward.1} parent=1 // pred_check_branch
      %216 = sbr.rel (0) target = $region29
    $region28: #{mlp_forward.1} parent=1 // pred_region
      _
    $region29: #{mlp_forward.1} parent=1 // pred_fallthru
      _
    // Predicated region
    $region30: #{mlp_forward.1} parent=1 // pred_check
      _
    $region31: #{mlp_forward.1} parent=1 // pred_check_branch
      %218 = sbr.rel (0) target = $region33
    $region32: #{mlp_forward.1} parent=1 // pred_region
      _
    $region33: #{mlp_forward.1} parent=1 // pred_fallthru
      _
    %219 = vsyncpa [#allocation3], 1

</llo_original>
